<compile_context>
chip_gen: v5e
topology: v5e:2x2
jax: 0.10.0
libtpu: 0.0.40
codegen_flags: <defaults>
</compile_context>

<pallas_src>
import functools
from math import sqrt

import jax
import jax.numpy as jnp
from jax import lax
from jax.experimental import pallas as pl
from jax.experimental.pallas import tpu as pltpu

_VMEM_LIMIT_BYTES = 64 * 1024 * 1024


def _round_up(a, b):
    return (a + b - 1) // b * b


# -----------------------------------------------------------------------------
# Pass 1: fused q/k/v projection (runs once per token).
# -----------------------------------------------------------------------------
def _qkv_projection_kernel(x_ref, w_ref, q_ref, k_ref, v_ref, *, dkp, norm_fact):
    x = x_ref[0]                                                  # (t, d_in_p)
    qkv = jnp.dot(x, w_ref[...], preferred_element_type=jnp.float32)
    q_ref[0] = (qkv[:, :dkp] * norm_fact).astype(q_ref.dtype)    # scale folded in
    k_ref[0] = qkv[:, dkp:2 * dkp].astype(k_ref.dtype)
    v_ref[0] = qkv[:, 2 * dkp:].astype(v_ref.dtype)


def _project_qkv(x_p, w_qkv, *, t, dkp, dvp, norm_fact, cdt):
    batch, n_p, d_in_p = x_p.shape
    n_tiles = n_p // t
    w_cols = w_qkv.shape[1]

    def build(single_buffer_weight):
        if single_buffer_weight:
            # Weight block is grid-invariant: fetch once, keep a single buffer.
            w_spec = pl.BlockSpec((d_in_p, w_cols), lambda b, i: (0, 0),
                                  pipeline_mode=pl.Buffered(1))
        else:
            w_spec = pl.BlockSpec((d_in_p, w_cols), lambda b, i: (0, 0))
        return pl.pallas_call(
            functools.partial(_qkv_projection_kernel, dkp=dkp, norm_fact=norm_fact),
            out_shape=(
                jax.ShapeDtypeStruct((batch, n_p, dkp), cdt),
                jax.ShapeDtypeStruct((batch, n_p, dkp), cdt),
                jax.ShapeDtypeStruct((batch, n_p, dvp), cdt),
            ),
            grid_spec=pltpu.PrefetchScalarGridSpec(
                num_scalar_prefetch=0,
                grid=(batch, n_tiles),
                in_specs=[
                    pl.BlockSpec((1, t, d_in_p), lambda b, i: (b, i, 0)),
                    w_spec,
                ],
                out_specs=(
                    pl.BlockSpec((1, t, dkp), lambda b, i: (b, i, 0)),
                    pl.BlockSpec((1, t, dkp), lambda b, i: (b, i, 0)),
                    pl.BlockSpec((1, t, dvp), lambda b, i: (b, i, 0)),
                ),
            ),
            compiler_params=pltpu.CompilerParams(
                dimension_semantics=("parallel", "parallel"),
                vmem_limit_bytes=_VMEM_LIMIT_BYTES),
        )

    try:
        return build(True)(x_p, w_qkv)
    except Exception:
        # Fallback for JAX builds without single-buffered BlockSpec support.
        return build(False)(x_p, w_qkv)


# -----------------------------------------------------------------------------
# Pass 2: flash attention over pre-projected q/k/v tiles.
# -----------------------------------------------------------------------------
def _flash_attention_kernel(
    q_ref,        # (1, tq, dkp)  pre-scaled q tile
    k_ref,        # (1, tk, dkp)
    v_ref,        # (1, tk, dvp)
    o_ref,        # (1, tq, dvp)
    m_scr,        # VMEM (tq, 1)   f32 running max
    l_scr,        # VMEM (tq, 1)   f32 running denominator
    acc_scr,      # VMEM (tq, dvp) f32 running numerator
    *, n_actual, n_padded, tk):
    ki = pl.program_id(2)
    nk = pl.num_programs(2)

    @pl.when(ki == 0)
    def _():
        m_scr[...] = jnp.full_like(m_scr, -jnp.inf)
        l_scr[...] = jnp.zeros_like(l_scr)
        acc_scr[...] = jnp.zeros_like(acc_scr)

    q = q_ref[0]
    k = k_ref[0]
    v = v_ref[0]

    # scores: contract the shared last dim (no k transpose materialized)
    s = lax.dot_general(q, k, (((1,), (1,)), ((), ())),
                        preferred_element_type=jnp.float32)       # (tq, tk) f32

    def online_update(scores):
        m_prev = m_scr[...]
        m_new = jnp.maximum(m_prev, jnp.max(scores, axis=-1, keepdims=True))
        alpha = jnp.exp(m_prev - m_new)
        p = jnp.exp(scores - m_new)                               # (tq, tk) f32
        l_scr[...] = alpha * l_scr[...] + jnp.sum(p, axis=-1, keepdims=True)
        acc_scr[...] = alpha * acc_scr[...] + jnp.dot(
            p.astype(v.dtype), v, preferred_element_type=jnp.float32)
        m_scr[...] = m_new

    if n_padded != n_actual:
        # Padded kv columns live only in the tail kv tile -> mask only there.
        @pl.when(ki == nk - 1)
        def _():
            col = ki * tk + lax.broadcasted_iota(jnp.int32, s.shape, 1)
            online_update(jnp.where(col < n_actual, s, jnp.float32(-1e30)))

        @pl.when(ki != nk - 1)
        def _():
            online_update(s)
    else:
        online_update(s)

    @pl.when(ki == nk - 1)
    def _():
        # exact reciprocal once per output tile to hold 1e-5 tolerance.
        inv_l = pl.reciprocal(l_scr[...], approx=False)
        o_ref[0] = (acc_scr[...] * inv_l).astype(o_ref.dtype)


def self_attention(x, wq, wk, wv, *, tile=256, compute_dtype=None):
    """x: [B, n, dim_in]; wq/wk: [dim_k, dim_in]; wv: [dim_v, dim_in] (nn.Linear layout)."""
    batch, n, dim_in = x.shape
    dim_k = wq.shape[0]
    dim_v = wv.shape[0]
    norm_fact = 1.0 / sqrt(dim_k)
    out_dtype = x.dtype
    cdt = jnp.dtype(compute_dtype) if compute_dtype is not None else jnp.dtype(x.dtype)

    # Lane-dense padded dims (128 multiples); sequence tile rounded to the
    # sublane packing of the compute dtype (8 f32 / 16 bf16 / 32 int8) and
    # capped at 256 (v7x 64 MiB VMEM).  On v6e a larger kv tile (e.g. 512)
    # would amortize a bit more grid overhead if VMEM allows.
    d_in_p = _round_up(dim_in, 128)
    dkp = _round_up(dim_k, 128)
    dvp = _round_up(dim_v, 128)
    sub = max(8, 32 // cdt.itemsize)
    t = min(_round_up(tile, sub), _round_up(n, sub))
    n_p = _round_up(n, t)
    n_tiles = n_p // t

    # Zero-pad x (zero feature padding is exact; padded kv rows are masked
    # in-kernel, padded q rows are sliced off below).
    x_p = jnp.zeros((batch, n_p, d_in_p), cdt).at[:, :n, :dim_in].set(x.astype(cdt))

    # Fused, pre-transposed weight: columns [0:dkp]=Wq, [dkp:2dkp]=Wk, [2dkp:]=Wv.
    w_qkv = jnp.zeros((d_in_p, 2 * dkp + dvp), cdt)
    w_qkv = w_qkv.at[:dim_in, :dim_k].set(wq.T.astype(cdt))
    w_qkv = w_qkv.at[:dim_in, dkp:dkp + dim_k].set(wk.T.astype(cdt))
    w_qkv = w_qkv.at[:dim_in, 2 * dkp:2 * dkp + dim_v].set(wv.T.astype(cdt))

    # ---- pass 1: project q/k/v once per token (no per-kv-tile recompute).
    q_p, k_p, v_p = _project_qkv(x_p, w_qkv, t=t, dkp=dkp, dvp=dvp,
                                 norm_fact=norm_fact, cdt=cdt)

    # ---- pass 2: flash attention, grid = (batch, q tiles, kv tiles).
    kernel = functools.partial(_flash_attention_kernel,
                               n_actual=n, n_padded=n_p, tk=t)
    out_p = pl.pallas_call(
        kernel,
        out_shape=jax.ShapeDtypeStruct((batch, n_p, dvp), out_dtype),
        grid_spec=pltpu.PrefetchScalarGridSpec(
            num_scalar_prefetch=0,
            grid=(batch, n_tiles, n_tiles),
            in_specs=[
                pl.BlockSpec((1, t, dkp), lambda b, qi, ki: (b, qi, 0)),
                pl.BlockSpec((1, t, dkp), lambda b, qi, ki: (b, ki, 0)),
                pl.BlockSpec((1, t, dvp), lambda b, qi, ki: (b, ki, 0)),
            ],
            out_specs=pl.BlockSpec((1, t, dvp), lambda b, qi, ki: (b, qi, 0)),
            scratch_shapes=[
                pltpu.VMEM((t, 1), jnp.float32),    # running max m
                pltpu.VMEM((t, 1), jnp.float32),    # running denominator l
                pltpu.VMEM((t, dvp), jnp.float32),  # running numerator acc
            ],
        ),
        compiler_params=pltpu.CompilerParams(
            dimension_semantics=("parallel", "parallel", "arbitrary"),
            vmem_limit_bytes=_VMEM_LIMIT_BYTES),
    )(q_p, k_p, v_p)

    return out_p[:, :n, :dim_v]


def self_attention_ref(x, wq, wk, wv):
    """Pure-JAX reference mirroring the PyTorch forward."""
    dim_k = wq.shape[0]
    q = jnp.einsum("bnd,kd->bnk", x, wq)
    k = jnp.einsum("bnd,kd->bnk", x, wk)
    v = jnp.einsum("bnd,vd->bnv", x, wv)
    dist = jnp.einsum("bik,bjk->bij", q, k) / sqrt(dim_k)
    dist = jax.nn.softmax(dist, axis=-1)
    return jnp.einsum("bij,bjv->biv", dist, v)


def _run_case(key, batch, n, dim_in, dim_k, dim_v):
    kx, kq, kk, kv = jax.random.split(key, 4)
    x = jax.random.normal(kx, (batch, n, dim_in), dtype=jnp.float32)
    bound = 1.0 / sqrt(dim_in)
    wq = jax.random.uniform(kq, (dim_k, dim_in), jnp.float32, -bound, bound)
    wk = jax.random.uniform(kk, (dim_k, dim_in), jnp.float32, -bound, bound)
    wv = jax.random.uniform(kv, (dim_v, dim_in), jnp.float32, -bound, bound)

    out = jax.block_until_ready(self_attention(x, wq, wk, wv))
    ref = self_attention_ref(x, wq, wk, wv)
    assert out.shape == (batch, n, dim_v)
    assert jnp.allclose(out, ref, atol=1e-5, rtol=1e-5)


if __name__ == "__main__":
    key = jax.random.PRNGKey(0)
    k0, k1 = jax.random.split(key)

    # Small shapes consistent with the module: batch=2, seq=8, dim_in=32,
    # dim_k=16, dim_v=32 (all dims padded to 128 lanes inside the wrapper).
    _run_case(k0, batch=2, n=8, dim_in=32, dim_k=16, dim_v=32)

    # Ragged shapes: exercises sequence padding + tail-tile kv masking.
    _run_case(k1, batch=2, n=10, dim_in=20, dim_k=12, dim_v=24)

    print("KERNEL_OK")
</pallas_src>

<mosaic_0001>
module attributes {stable_mosaic.version = 11 : i64} {
  func.func @_qkv_projection_kernel(%arg0: i32, %arg1: i32, %arg2: memref<1x8x128xf32, #tpu.memory_space<vmem>>, %arg3: memref<128x384xf32, #tpu.memory_space<vmem>>, %arg4: memref<1x8x128xf32, #tpu.memory_space<vmem>>, %arg5: memref<1x8x128xf32, #tpu.memory_space<vmem>>, %arg6: memref<1x8x128xf32, #tpu.memory_space<vmem>>) attributes {dimension_semantics = [#tpu.dimension_semantics<parallel>, #tpu.dimension_semantics<parallel>], iteration_bounds = array<i64: 2, 1>, scalar_prefetch = 0 : i64, scratch_operands = 0 : i64, tpu.core_type = #tpu.core_type<tc>, window_params = [{transform_indices = @transform_0, window_bounds = array<i64: 1, 8, 128>}, {pipeline_mode = #tpu.pipeline_mode<synchronous>, transform_indices = @transform_1, window_bounds = array<i64: 128, 384>}, {transform_indices = @transform_2, window_bounds = array<i64: 1, 8, 128>}, {transform_indices = @transform_3, window_bounds = array<i64: 1, 8, 128>}, {transform_indices = @transform_4, window_bounds = array<i64: 1, 8, 128>}]} {
    %c0 = arith.constant 0 : index
    %c0_0 = arith.constant 0 : index
    %c0_1 = arith.constant 0 : index
    %0 = vector.load %arg2[%c0, %c0_0, %c0_1] : memref<1x8x128xf32, #tpu.memory_space<vmem>>, vector<1x8x128xf32>
    %1 = vector.shape_cast %0 : vector<1x8x128xf32> to vector<8x128xf32>
    %c0_2 = arith.constant 0 : index
    %c0_3 = arith.constant 0 : index
    %2 = vector.load %arg3[%c0_2, %c0_3] : memref<128x384xf32, #tpu.memory_space<vmem>>, vector<128x384xf32>
    %cst = arith.constant dense<0.000000e+00> : vector<8x384xf32>
    %3 = tpu.matmul %1, %2, %cst {dimension_numbers = #tpu.dot_dimension_numbers<[1], [0], [0], [1], [0, 0, 1, 1], [], []>} : vector<8x128xf32>, vector<128x384xf32>, vector<8x384xf32> -> vector<8x384xf32>
    %4 = vector.extract_strided_slice %3 {offsets = [0, 0], sizes = [8, 128], strides = [1, 1]} : vector<8x384xf32> to vector<8x128xf32>
    %cst_4 = arith.constant 2.500000e-01 : f32
    %5 = vector.broadcast %cst_4 : f32 to vector<8x128xf32>
    %6 = arith.mulf %4, %5 : vector<8x128xf32>
    %c0_5 = arith.constant 0 : index
    %c0_6 = arith.constant 0 : index
    %c0_7 = arith.constant 0 : index
    %7 = vector.load %arg4[%c0_5, %c0_6, %c0_7] : memref<1x8x128xf32, #tpu.memory_space<vmem>>, vector<1x8x128xf32>
    %8 = vector.shape_cast %7 : vector<1x8x128xf32> to vector<8x128xf32>
    %9 = vector.shape_cast %6 : vector<8x128xf32> to vector<1x8x128xf32>
    tpu.vector_store %arg4[%c0_5, %c0_6, %c0_7], %9 {strides = array<i32>} : memref<1x8x128xf32, #tpu.memory_space<vmem>>, vector<1x8x128xf32>,
    %10 = vector.extract_strided_slice %3 {offsets = [0, 128], sizes = [8, 128], strides = [1, 1]} : vector<8x384xf32> to vector<8x128xf32>
    %c0_8 = arith.constant 0 : index
    %c0_9 = arith.constant 0 : index
    %c0_10 = arith.constant 0 : index
    %11 = vector.load %arg5[%c0_8, %c0_9, %c0_10] : memref<1x8x128xf32, #tpu.memory_space<vmem>>, vector<1x8x128xf32>
    %12 = vector.shape_cast %11 : vector<1x8x128xf32> to vector<8x128xf32>
    %13 = vector.shape_cast %10 : vector<8x128xf32> to vector<1x8x128xf32>
    tpu.vector_store %arg5[%c0_8, %c0_9, %c0_10], %13 {strides = array<i32>} : memref<1x8x128xf32, #tpu.memory_space<vmem>>, vector<1x8x128xf32>,
    %14 = vector.extract_strided_slice %3 {offsets = [0, 256], sizes = [8, 128], strides = [1, 1]} : vector<8x384xf32> to vector<8x128xf32>
    %c0_11 = arith.constant 0 : index
    %c0_12 = arith.constant 0 : index
    %c0_13 = arith.constant 0 : index
    %15 = vector.load %arg6[%c0_11, %c0_12, %c0_13] : memref<1x8x128xf32, #tpu.memory_space<vmem>>, vector<1x8x128xf32>
    %16 = vector.shape_cast %15 : vector<1x8x128xf32> to vector<8x128xf32>
    %17 = vector.shape_cast %14 : vector<8x128xf32> to vector<1x8x128xf32>
    tpu.vector_store %arg6[%c0_11, %c0_12, %c0_13], %17 {strides = array<i32>} : memref<1x8x128xf32, #tpu.memory_space<vmem>>, vector<1x8x128xf32>,
    return
  }
  func.func @transform_0(%arg0: i32, %arg1: i32) -> (i32, i32, i32) {
    %c0_i32 = arith.constant 0 : i32
    %c0_i32_0 = arith.constant 0 : i32
    return %arg0, %arg1, %c0_i32 : i32, i32, i32
  }
  func.func @transform_1(%arg0: i32, %arg1: i32) -> (i32, i32) {
    %c0_i32 = arith.constant 0 : i32
    %c0_i32_0 = arith.constant 0 : i32
    %c0_i32_1 = arith.constant 0 : i32
    return %c0_i32, %c0_i32_0 : i32, i32
  }
  func.func @transform_2(%arg0: i32, %arg1: i32) -> (i32, i32, i32) {
    %c0_i32 = arith.constant 0 : i32
    %c0_i32_0 = arith.constant 0 : i32
    return %arg0, %arg1, %c0_i32 : i32, i32, i32
  }
  func.func @transform_3(%arg0: i32, %arg1: i32) -> (i32, i32, i32) {
    %c0_i32 = arith.constant 0 : i32
    %c0_i32_0 = arith.constant 0 : i32
    return %arg0, %arg1, %c0_i32 : i32, i32, i32
  }
  func.func @transform_4(%arg0: i32, %arg1: i32) -> (i32, i32, i32) {
    %c0_i32 = arith.constant 0 : i32
    %c0_i32_0 = arith.constant 0 : i32
    return %arg0, %arg1, %c0_i32 : i32, i32, i32
  }
}

module attributes {stable_mosaic.version = 11 : i64} {
  func.func @_qkv_projection_kernel(%arg0: i32, %arg1: i32, %arg2: memref<1x8x128xf32, #tpu.memory_space<vmem>>, %arg3: memref<128x384xf32, #tpu.memory_space<vmem>>, %arg4: memref<1x8x128xf32, #tpu.memory_space<vmem>>, %arg5: memref<1x8x128xf32, #tpu.memory_space<vmem>>, %arg6: memref<1x8x128xf32, #tpu.memory_space<vmem>>) attributes {dimension_semantics = [#tpu.dimension_semantics<parallel>, #tpu.dimension_semantics<parallel>], iteration_bounds = array<i64: 2, 1>, scalar_prefetch = 0 : i64, scratch_operands = 0 : i64, tpu.core_type = #tpu.core_type<tc>, window_params = [{transform_indices = @transform_0, window_bounds = array<i64: 1, 8, 128>}, {pipeline_mode = #tpu.pipeline_mode<synchronous>, transform_indices = @transform_1, window_bounds = array<i64: 128, 384>}, {transform_indices = @transform_2, window_bounds = array<i64: 1, 8, 128>}, {transform_indices = @transform_3, window_bounds = array<i64: 1, 8, 128>}, {transform_indices = @transform_4, window_bounds = array<i64: 1, 8, 128>}]} {
    %c0 = arith.constant 0 : index
    %c0_0 = arith.constant 0 : index
    %c0_1 = arith.constant 0 : index
    %0 = vector.load %arg2[%c0, %c0_0, %c0_1] : memref<1x8x128xf32, #tpu.memory_space<vmem>>, vector<1x8x128xf32>
    %1 = vector.shape_cast %0 : vector<1x8x128xf32> to vector<8x128xf32>
    %c0_2 = arith.constant 0 : index
    %c0_3 = arith.constant 0 : index
    %2 = vector.load %arg3[%c0_2, %c0_3] : memref<128x384xf32, #tpu.memory_space<vmem>>, vector<128x384xf32>
    %cst = arith.constant dense<0.000000e+00> : vector<8x384xf32>
    %3 = tpu.matmul %1, %2, %cst {dimension_numbers = #tpu.dot_dimension_numbers<[1], [0], [0], [1], [0, 0, 1, 1], [], []>} : vector<8x128xf32>, vector<128x384xf32>, vector<8x384xf32> -> vector<8x384xf32>
    %4 = vector.extract_strided_slice %3 {offsets = [0, 0], sizes = [8, 128], strides = [1, 1]} : vector<8x384xf32> to vector<8x128xf32>
    %cst_4 = arith.constant 2.500000e-01 : f32
    %5 = vector.broadcast %cst_4 : f32 to vector<8x128xf32>
    %6 = arith.mulf %4, %5 : vector<8x128xf32>
    %c0_5 = arith.constant 0 : index
    %c0_6 = arith.constant 0 : index
    %c0_7 = arith.constant 0 : index
    %7 = vector.load %arg4[%c0_5, %c0_6, %c0_7] : memref<1x8x128xf32, #tpu.memory_space<vmem>>, vector<1x8x128xf32>
    %8 = vector.shape_cast %7 : vector<1x8x128xf32> to vector<8x128xf32>
    %9 = vector.shape_cast %6 : vector<8x128xf32> to vector<1x8x128xf32>
    tpu.vector_store %arg4[%c0_5, %c0_6, %c0_7], %9 {strides = array<i32>} : memref<1x8x128xf32, #tpu.memory_space<vmem>>, vector<1x8x128xf32>,
    %10 = vector.extract_strided_slice %3 {offsets = [0, 128], sizes = [8, 128], strides = [1, 1]} : vector<8x384xf32> to vector<8x128xf32>
    %c0_8 = arith.constant 0 : index
    %c0_9 = arith.constant 0 : index
    %c0_10 = arith.constant 0 : index
    %11 = vector.load %arg5[%c0_8, %c0_9, %c0_10] : memref<1x8x128xf32, #tpu.memory_space<vmem>>, vector<1x8x128xf32>
    %12 = vector.shape_cast %11 : vector<1x8x128xf32> to vector<8x128xf32>
    %13 = vector.shape_cast %10 : vector<8x128xf32> to vector<1x8x128xf32>
    tpu.vector_store %arg5[%c0_8, %c0_9, %c0_10], %13 {strides = array<i32>} : memref<1x8x128xf32, #tpu.memory_space<vmem>>, vector<1x8x128xf32>,
    %14 = vector.extract_strided_slice %3 {offsets = [0, 256], sizes = [8, 128], strides = [1, 1]} : vector<8x384xf32> to vector<8x128xf32>
    %c0_11 = arith.constant 0 : index
    %c0_12 = arith.constant 0 : index
    %c0_13 = arith.constant 0 : index
    %15 = vector.load %arg6[%c0_11, %c0_12, %c0_13] : memref<1x8x128xf32, #tpu.memory_space<vmem>>, vector<1x8x128xf32>
    %16 = vector.shape_cast %15 : vector<1x8x128xf32> to vector<8x128xf32>
    %17 = vector.shape_cast %14 : vector<8x128xf32> to vector<1x8x128xf32>
    tpu.vector_store %arg6[%c0_11, %c0_12, %c0_13], %17 {strides = array<i32>} : memref<1x8x128xf32, #tpu.memory_space<vmem>>, vector<1x8x128xf32>,
    return
  }
  func.func @transform_0(%arg0: i32, %arg1: i32) -> (i32, i32, i32) {
    %c0_i32 = arith.constant 0 : i32
    %c0_i32_0 = arith.constant 0 : i32
    return %arg0, %arg1, %c0_i32 : i32, i32, i32
  }
  func.func @transform_1(%arg0: i32, %arg1: i32) -> (i32, i32) {
    %c0_i32 = arith.constant 0 : i32
    %c0_i32_0 = arith.constant 0 : i32
    %c0_i32_1 = arith.constant 0 : i32
    return %c0_i32, %c0_i32_0 : i32, i32
  }
  func.func @transform_2(%arg0: i32, %arg1: i32) -> (i32, i32, i32) {
    %c0_i32 = arith.constant 0 : i32
    %c0_i32_0 = arith.constant 0 : i32
    return %arg0, %arg1, %c0_i32 : i32, i32, i32
  }
  func.func @transform_3(%arg0: i32, %arg1: i32) -> (i32, i32, i32) {
    %c0_i32 = arith.constant 0 : i32
    %c0_i32_0 = arith.constant 0 : i32
    return %arg0, %arg1, %c0_i32 : i32, i32, i32
  }
  func.func @transform_4(%arg0: i32, %arg1: i32) -> (i32, i32, i32) {
    %c0_i32 = arith.constant 0 : i32
    %c0_i32_0 = arith.constant 0 : i32
    return %arg0, %arg1, %c0_i32 : i32, i32, i32
  }
}

</mosaic_0001>

<llo_original>
// kernel: tpu_custom_call.1
$region0: #{tpu_custom_call.1}
  #allocation0 [shape = 'u32[]', space=smem, size = 0x4, offset = 0x4, fixed_abs, tag = 'smem constant byte address 0x4 - core index']
  #allocation1 [shape = 'u32[72,128]{1,0:T(1,128)}', space=vmem, size = 0x9000, scoped, tag = 'internal scratch']
  %s0 = inlined_call_operand.hbm [shape: f32[2,8,128], index: 0, kind: input, shape index: {}]
  %s1 = inlined_call_operand.hbm [shape: f32[128,384], index: 1, kind: input, shape index: {}]
  %s2 = inlined_call_operand.hbm [shape: f32[2,8,128], index: 2, kind: output, shape index: {0}]
  %s3 = inlined_call_operand.hbm [shape: f32[2,8,128], index: 3, kind: output, shape index: {1}]
  %s4 = inlined_call_operand.hbm [shape: f32[2,8,128], index: 4, kind: output, shape index: {2}]
  %5 = xla_tuple %s2, %s3, %s4
  %s6 = sld [smem:[#allocation0]]
  $region65: #{tpu_custom_call.1} parent=0
    _
  %s8 = ssub.s32 1, %s6
  %s9 = scalar_select 0, %s8, %s6
  $region1: #{tpu_custom_call.1} parent=0
    #allocation2 [shape = 'u8[8192]{0}', space=vmem, size = 0x2000, scoped, tag = 'input window, operand 0']
    #allocation3 [shape = 's32[2]{0}', space=sflag, size = 0x8, scoped, tag = 'scoped memory for tpu_custom_call.1']
    #allocation4 [shape = 's32[2]{0}', space=sflag, size = 0x8, scoped, tag = 'scoped memory for tpu_custom_call.1']
    #allocation5 [shape = 'u8[196608]{0}', space=vmem, size = 0x30000, scoped, tag = 'input window, operand 1, single buffered']
    #allocation6 [shape = 's32[1]{0}', space=sflag, size = 0x4, scoped, tag = 'scoped memory for tpu_custom_call.1']
    #allocation7 [shape = 'u8[8192]{0}', space=vmem, size = 0x2000, scoped, tag = 'output window, operand 0']
    #allocation8 [shape = 'u8[8192]{0}', space=vmem, size = 0x2000, scoped, tag = 'output window, operand 1']
    #allocation9 [shape = 's32[2]{0}', space=sflag, size = 0x8, scoped, tag = 'scoped memory for tpu_custom_call.1']
    #allocation10 [shape = 'u8[8192]{0}', space=vmem, size = 0x2000, scoped, tag = 'output window, operand 2']
    %10 = vsyncpa [#allocation3], 0
    %s11 = scalar_lea.sflag [#allocation3], 1
    %12 = vsyncpa %s11, 0
    %13 = vsyncpa [#allocation6], 0
    %14 = vsyncpa [#allocation4], 0
    %s15 = scalar_lea.sflag [#allocation4], 1
    %16 = vsyncpa %s15, 0
    %17 = vsyncpa [#allocation9], 0
    %s18 = scalar_lea.sflag [#allocation9], 1
    %19 = vsyncpa %s18, 0
    loop: start=0, step=1, limit=4
    $region2: #{tpu_custom_call.1} parent=1 // loop_pre_header
      _
    $region3: #{tpu_custom_call.1} parent=1 // loop_header
      %s21 = sphi 0, %s25
      %p22 = scmp.ge.s32.totalorder %s21, 4
      %s28 = sphi 0, %s40
      %s29 = sphi 0, %s36
      %s30 = sphi 0, %s28
      %s31 = sphi 0, %s29
      %s32 = sphi 0, %s30
      %s33 = sphi 0, %s31
      %s45 = sphi 0, %s47
      %s48 = sphi 0, %s45
      %s49 = sphi 0, %s48
      %s65 = sphi 0, %s49
      %s69 = sphi 0, %s69
      %s71 = sphi 0, %s69
      %s72 = sphi 0, %s71
      %s86 = sphi 0, %s72
      %s94 = sphi 0, %s96
      %s97 = sphi 0, %s94
      %s98 = sphi 0, %s97
      %s114 = sphi 0, %s98
      %s122 = sphi 0, %s124
      %s125 = sphi 0, %s122
      %s126 = sphi 0, %s125
      %s142 = sphi 0, %s126
      %s150 = sphi 0, %s152
      %s153 = sphi 0, %s150
      %s154 = sphi 0, %s153
      %s170 = sphi 0, %s154
    $region4: #{tpu_custom_call.1} parent=1 // loop_header_branch
      %24 = sbr.rel (%p22) target = $region8
    $region5: #{tpu_custom_call.1} parent=1 // loop_body
      %s26 = ssub.s32 %s21, 1
      %s27 = ssub.s32 %s21, 2
      %s34 = sadd.s32 1, %s29
      %p35 = scmp.ge.s32.totalorder %s34, 1
      %s36 = scalar_select %p35, 0, %s34
      %s37 = sadd.s32 1, %s28
      %s38 = scalar_select %p35, %s37, %s28
      %p39 = scmp.ge.s32.totalorder %s38, 2
      %s40 = scalar_select %p39, 0, %s38
      %s41 = ssub.s32 %s28, %s40
      %s42 = ssub.s32 %s29, %s36
      %s43 = sor.u32 %s41, %s42
      %p44 = scmp.eq.s32.totalorder %s43, 0
      %s46 = sadd.s32 %s45, 1
      %s47 = scalar_select %p44, %s45, %s46
      %p50 = pneg %p44
      %p51 = scmp.eq.s32.totalorder %s21, 1
      %p52 = por %p50, %p51
      %p53 = scmp.ne.s32.totalorder %s45, %s48
      %p54 = scmp.eq.s32.totalorder %s21, 0
      %p55 = por %p53, %p54
      %p56 = scmp.ne.s32.totalorder %s45, %s48
      %p57 = scmp.eq.s32.totalorder %s26, 1
      %p58 = por %p56, %p57
      %p59 = scmp.ne.s32.totalorder %s48, %s49
      %p60 = scmp.eq.s32.totalorder %s26, 0
      %p61 = por %p59, %p60
      %p62 = scmp.ne.s32.totalorder %s48, %s49
      %p63 = scmp.eq.s32.totalorder %s27, 1
      %p64 = por %p62, %p63
      %p66 = scmp.ne.s32.totalorder %s49, %s65
      %p67 = scmp.eq.s32.totalorder %s27, 0
      %p68 = por %p66, %p67
      %s70 = sadd.s32 %s69, 1
      %p73 = scmp.eq.s32.totalorder %s21, 1
      %p74 = scmp.ne.s32.totalorder %s69, %s71
      %p75 = scmp.eq.s32.totalorder %s21, 0
      %p76 = por %p74, %p75
      %p77 = scmp.ne.s32.totalorder %s69, %s71
      %p78 = scmp.eq.s32.totalorder %s26, 1
      %p79 = por %p77, %p78
      %p80 = scmp.ne.s32.totalorder %s71, %s72
      %p81 = scmp.eq.s32.totalorder %s26, 0
      %p82 = por %p80, %p81
      %p83 = scmp.ne.s32.totalorder %s71, %s72
      %p84 = scmp.eq.s32.totalorder %s27, 1
      %p85 = por %p83, %p84
      %p87 = scmp.ne.s32.totalorder %s72, %s86
      %p88 = scmp.eq.s32.totalorder %s27, 0
      %p89 = por %p87, %p88
      %s90 = ssub.s32 %s28, %s40
      %s91 = ssub.s32 %s29, %s36
      %s92 = sor.u32 %s90, %s91
      %p93 = scmp.eq.s32.totalorder %s92, 0
      %s95 = sadd.s32 %s94, 1
      %s96 = scalar_select %p93, %s94, %s95
      %p99 = pneg %p93
      %p100 = scmp.eq.s32.totalorder %s21, 1
      %p101 = por %p99, %p100
      %p102 = scmp.ne.s32.totalorder %s94, %s97
      %p103 = scmp.eq.s32.totalorder %s21, 0
      %p104 = por %p102, %p103
      %p105 = scmp.ne.s32.totalorder %s94, %s97
      %p106 = scmp.eq.s32.totalorder %s26, 1
      %p107 = por %p105, %p106
      %p108 = scmp.ne.s32.totalorder %s97, %s98
      %p109 = scmp.eq.s32.totalorder %s26, 0
      %p110 = por %p108, %p109
      %p111 = scmp.ne.s32.totalorder %s97, %s98
      %p112 = scmp.eq.s32.totalorder %s27, 1
      %p113 = por %p111, %p112
      %p115 = scmp.ne.s32.totalorder %s98, %s114
      %p116 = scmp.eq.s32.totalorder %s27, 0
      %p117 = por %p115, %p116
      %s118 = ssub.s32 %s28, %s40
      %s119 = ssub.s32 %s29, %s36
      %s120 = sor.u32 %s118, %s119
      %p121 = scmp.eq.s32.totalorder %s120, 0
      %s123 = sadd.s32 %s122, 1
      %s124 = scalar_select %p121, %s122, %s123
      %p127 = pneg %p121
      %p128 = scmp.eq.s32.totalorder %s21, 1
      %p129 = por %p127, %p128
      %p130 = scmp.ne.s32.totalorder %s122, %s125
      %p131 = scmp.eq.s32.totalorder %s21, 0
      %p132 = por %p130, %p131
      %p133 = scmp.ne.s32.totalorder %s122, %s125
      %p134 = scmp.eq.s32.totalorder %s26, 1
      %p135 = por %p133, %p134
      %p136 = scmp.ne.s32.totalorder %s125, %s126
      %p137 = scmp.eq.s32.totalorder %s26, 0
      %p138 = por %p136, %p137
      %p139 = scmp.ne.s32.totalorder %s125, %s126
      %p140 = scmp.eq.s32.totalorder %s27, 1
      %p141 = por %p139, %p140
      %p143 = scmp.ne.s32.totalorder %s126, %s142
      %p144 = scmp.eq.s32.totalorder %s27, 0
      %p145 = por %p143, %p144
      %s146 = ssub.s32 %s28, %s40
      %s147 = ssub.s32 %s29, %s36
      %s148 = sor.u32 %s146, %s147
      %p149 = scmp.eq.s32.totalorder %s148, 0
      %s151 = sadd.s32 %s150, 1
      %s152 = scalar_select %p149, %s150, %s151
      %p155 = pneg %p149
      %p156 = scmp.eq.s32.totalorder %s21, 1
      %p157 = por %p155, %p156
      %p158 = scmp.ne.s32.totalorder %s150, %s153
      %p159 = scmp.eq.s32.totalorder %s21, 0
      %p160 = por %p158, %p159
      %p161 = scmp.ne.s32.totalorder %s150, %s153
      %p162 = scmp.eq.s32.totalorder %s26, 1
      %p163 = por %p161, %p162
      %p164 = scmp.ne.s32.totalorder %s153, %s154
      %p165 = scmp.eq.s32.totalorder %s26, 0
      %p166 = por %p164, %p165
      %p167 = scmp.ne.s32.totalorder %s153, %s154
      %p168 = scmp.eq.s32.totalorder %s27, 1
      %p169 = por %p167, %p168
      %p171 = scmp.ne.s32.totalorder %s154, %s170
      %p172 = scmp.eq.s32.totalorder %s27, 0
      %p173 = por %p171, %p172
      %p174 = scmp.le.s32.totalorder 1, %s21
      %p175 = scmp.lt.s32.totalorder %s21, 3
      %p176 = pnand %p174, %p175
      %p177 = pneg %p176
      // Predicated region
      $region9: #{tpu_custom_call.1} parent=5 // pred_check
        _
      $region10: #{tpu_custom_call.1} parent=5 // pred_check_branch
        %179 = sbr.rel (%p176) target = $region12
      $region11: #{tpu_custom_call.1} parent=5 // pred_region
        %s180 = ssub.s32 %s21, 1
        // Predicated region
        $region13: #{tpu_custom_call.1} parent=11 // pred_check
          %p181 = pneg %p82
        $region14: #{tpu_custom_call.1} parent=11 // pred_check_branch
          %183 = sbr.rel (%p181) target = $region16
        $region15: #{tpu_custom_call.1} parent=11 // pred_region
          %185 = vsyncadd [#allocation6], 0
          %s186 = sshll.u32 %s1, 4
          %s187 = int_to_ptr.hbm [resolvable:$true] %s186
          %s188 = sshll.u32 [#allocation5], 4
          %s189 = int_to_ptr.vmem [resolvable:$true] %s188
          %194 = dma.hbm_to_vmem [thread:$0]  %s187, 6144, %s189, [#allocation6], 384, 384, 24
        $region16: #{tpu_custom_call.1} parent=11 // pred_fallthru
          _
      $region12: #{tpu_custom_call.1} parent=5 // pred_fallthru
        _
      %p195 = scmp.lt.s32.totalorder %s21, 2
      // Predicated region
      $region17: #{tpu_custom_call.1} parent=5 // pred_check
        %p196 = pneg %p195
      $region18: #{tpu_custom_call.1} parent=5 // pred_check_branch
        %198 = sbr.rel (%p196) target = $region20
      $region19: #{tpu_custom_call.1} parent=5 // pred_region
        // Predicated region
        $region21: #{tpu_custom_call.1} parent=19 // pred_check
          %p199 = pneg %p55
        $region22: #{tpu_custom_call.1} parent=19 // pred_check_branch
          %201 = sbr.rel (%p199) target = $region24
        $region23: #{tpu_custom_call.1} parent=19 // pred_region
          %s202 = sand.u32 %s45, 1
          %s203 = scalar_lea.sflag [#allocation3], %s202
          %s204 = sand.u32 %s45, 1
          %s205 = smul.addr %s204, 8
          %s206 = scalar_lea.vmem [#allocation2], %s205
          %208 = vsyncadd %s203, 0
          %s209 = sadd.s32 %s29, %s28
          %s210 = smul.addr %s209, 8
          %s211 = scalar_lea.hbm %s0, %s210
          %s213 = sshll.u32 %s211, 4
          %s214 = int_to_ptr.hbm [resolvable:$true] %s213
          %s215 = sshll.u32 %s206, 4
          %s216 = int_to_ptr.vmem [resolvable:$true] %s215
          %218 = dma.hbm_to_vmem [thread:$0]  %s214, 128, %s216, %s203
        $region24: #{tpu_custom_call.1} parent=19 // pred_fallthru
          _
      $region20: #{tpu_custom_call.1} parent=5 // pred_fallthru
        _
      %p219 = scmp.le.s32.totalorder 1, %s21
      %p220 = scmp.lt.s32.totalorder %s21, 3
      %p221 = pnand %p219, %p220
      %p222 = pneg %p221
      // Predicated region
      $region25: #{tpu_custom_call.1} parent=5 // pred_check
        _
      $region26: #{tpu_custom_call.1} parent=5 // pred_check_branch
        %224 = sbr.rel (%p221) target = $region28
      $region27: #{tpu_custom_call.1} parent=5 // pred_region
        %s225 = ssub.s32 %s21, 1
        %s226 = sand.u32 %s48, 1
        %s227 = scalar_lea.sflag [#allocation3], %s226
        %s228 = sand.u32 %s48, 1
        %s229 = smul.addr %s228, 8
        %s230 = scalar_lea.vmem [#allocation2], %s229
        // Predicated region
        $region29: #{tpu_custom_call.1} parent=27 // pred_check
          %p231 = pneg %p61
        $region30: #{tpu_custom_call.1} parent=27 // pred_check_branch
          %233 = sbr.rel (%p231) target = $region32
        $region31: #{tpu_custom_call.1} parent=27 // pred_region
          %235 = dma.done %s227, 128
        $region32: #{tpu_custom_call.1} parent=27 // pred_fallthru
          _
        // Predicated region
        $region33: #{tpu_custom_call.1} parent=27 // pred_check
          %p236 = pneg %p82
        $region34: #{tpu_custom_call.1} parent=27 // pred_check_branch
          %238 = sbr.rel (%p236) target = $region36
        $region35: #{tpu_custom_call.1} parent=27 // pred_region
          %240 = dma.done [#allocation6], 6144
        $region36: #{tpu_custom_call.1} parent=27 // pred_fallthru
          _
        %s241 = sand.u32 %s48, 1
        %s242 = scalar_lea.sflag [#allocation3], %s241
        %s243 = sand.u32 %s48, 1
        %s244 = smul.addr %s243, 8
        %s245 = scalar_lea.vmem [#allocation2], %s244
        %p246 = pneg %p61
        %p247 = pneg %p58
        %p248 = pneg %p82
        %p249 = pneg %p79
        %p250 = pneg %p110
        %p251 = pneg %p107
        %s252 = sand.u32 %s97, 1
        %s253 = scalar_lea.sflag [#allocation4], %s252
        %s254 = sand.u32 %s97, 1
        %s255 = smul.addr %s254, 8
        %s256 = scalar_lea.vmem [#allocation7], %s255
        %p257 = pneg %p138
        %p258 = pneg %p135
        %s259 = sand.u32 %s26, 1
        %s260 = scalar_lea.sflag [#allocation9], %s259
        %s261 = sand.u32 %s125, 1
        %s262 = smul.addr %s261, 8
        %s263 = scalar_lea.vmem [#allocation8], %s262
        %p264 = pneg %p166
        %p265 = pneg %p163
        %s266 = sand.u32 %s26, 1
        %s267 = scalar_lea.sflag [#allocation9], %s266
        %s268 = sand.u32 %s153, 1
        %s269 = smul.addr %s268, 8
        %s270 = scalar_lea.vmem [#allocation10], %s269
        %v271 = vld [vmem:[%s230] sm:$0xff]
        %v272 = vld [vmem:[#allocation5] sm:$0xff]
        %v273 = vld [vmem:[#allocation5 + $0x8] sm:$0xff]
        %v274 = vld [vmem:[#allocation5 + $0x10] sm:$0xff]
        %v275 = vld [vmem:[#allocation5 + $0x18] sm:$0xff]
        %v276 = vld [vmem:[#allocation5 + $0x20] sm:$0xff]
        %v277 = vld [vmem:[#allocation5 + $0x28] sm:$0xff]
        %v278 = vld [vmem:[#allocation5 + $0x30] sm:$0xff]
        %v279 = vld [vmem:[#allocation5 + $0x38] sm:$0xff]
        %v280 = vld [vmem:[#allocation5 + $0x40] sm:$0xff]
        %v281 = vld [vmem:[#allocation5 + $0x48] sm:$0xff]
        %v282 = vld [vmem:[#allocation5 + $0x50] sm:$0xff]
        %v283 = vld [vmem:[#allocation5 + $0x58] sm:$0xff]
        %v284 = vld [vmem:[#allocation5 + $0x60] sm:$0xff]
        %v285 = vld [vmem:[#allocation5 + $0x68] sm:$0xff]
        %v286 = vld [vmem:[#allocation5 + $0x70] sm:$0xff]
        %v287 = vld [vmem:[#allocation5 + $0x78] sm:$0xff]
        %v288 = vld [vmem:[#allocation5 + $0x80] sm:$0xff]
        %v289 = vld [vmem:[#allocation5 + $0x88] sm:$0xff]
        %v290 = vld [vmem:[#allocation5 + $0x90] sm:$0xff]
        %v291 = vld [vmem:[#allocation5 + $0x98] sm:$0xff]
        %v292 = vld [vmem:[#allocation5 + $0xa0] sm:$0xff]
        %v293 = vld [vmem:[#allocation5 + $0xa8] sm:$0xff]
        %v294 = vld [vmem:[#allocation5 + $0xb0] sm:$0xff]
        %v295 = vld [vmem:[#allocation5 + $0xb8] sm:$0xff]
        %v296 = vld [vmem:[#allocation5 + $0xc0] sm:$0xff]
        %v297 = vld [vmem:[#allocation5 + $0xc8] sm:$0xff]
        %v298 = vld [vmem:[#allocation5 + $0xd0] sm:$0xff]
        %v299 = vld [vmem:[#allocation5 + $0xd8] sm:$0xff]
        %v300 = vld [vmem:[#allocation5 + $0xe0] sm:$0xff]
        %v301 = vld [vmem:[#allocation5 + $0xe8] sm:$0xff]
        %v302 = vld [vmem:[#allocation5 + $0xf0] sm:$0xff]
        %v303 = vld [vmem:[#allocation5 + $0xf8] sm:$0xff]
        %v304 = vld [vmem:[#allocation5 + $0x100] sm:$0xff]
        %v305 = vld [vmem:[#allocation5 + $0x108] sm:$0xff]
        %v306 = vld [vmem:[#allocation5 + $0x110] sm:$0xff]
        %v307 = vld [vmem:[#allocation5 + $0x118] sm:$0xff]
        %v308 = vld [vmem:[#allocation5 + $0x120] sm:$0xff]
        %v309 = vld [vmem:[#allocation5 + $0x128] sm:$0xff]
        %v310 = vld [vmem:[#allocation5 + $0x130] sm:$0xff]
        %v311 = vld [vmem:[#allocation5 + $0x138] sm:$0xff]
        %v312 = vld [vmem:[#allocation5 + $0x140] sm:$0xff]
        %v313 = vld [vmem:[#allocation5 + $0x148] sm:$0xff]
        %v314 = vld [vmem:[#allocation5 + $0x150] sm:$0xff]
        %v315 = vld [vmem:[#allocation5 + $0x158] sm:$0xff]
        %v316 = vld [vmem:[#allocation5 + $0x160] sm:$0xff]
        %v317 = vld [vmem:[#allocation5 + $0x168] sm:$0xff]
        %v318 = vld [vmem:[#allocation5 + $0x170] sm:$0xff]
        %v319 = vld [vmem:[#allocation5 + $0x178] sm:$0xff]
        %320 = vmatpush.msra.mxu0 %v317
        %321 = vmatpush.msra.mxu0 %v314
        %322 = vmatpush.msra.mxu0 %v311
        %323 = vmatpush.msra.mxu0 %v308
        %324 = vmatpush.msra.mxu0 %v305
        %325 = vmatpush.msra.mxu0 %v302
        %326 = vmatpush.msra.mxu0 %v299
        %327 = vmatpush.msra.mxu0 %v296
        %328 = vmatpush.msra.mxu0 %v293
        %329 = vmatpush.msra.mxu0 %v290
        %330 = vmatpush.msra.mxu0 %v287
        %331 = vmatpush.msra.mxu0 %v284
        %332 = vmatpush.msra.mxu0 %v281
        %333 = vmatpush.msra.mxu0 %v278
        %334 = vmatpush.msra.mxu0 %v275
        %335 = vmatpush.msra.mxu0 %v272
        %336 = vmatmul.f32.gmra.mxu0 %v271
        %v337 = vpop.f32.mrf.mxu0
        %v338 = vadd.f32 0.0, %v337
        %339 = vdwg.mxu0
        %340 = vmatpush.msra.mxu0 %v318
        %341 = vmatpush.msra.mxu0 %v315
        %342 = vmatpush.msra.mxu0 %v312
        %343 = vmatpush.msra.mxu0 %v309
        %344 = vmatpush.msra.mxu0 %v306
        %345 = vmatpush.msra.mxu0 %v303
        %346 = vmatpush.msra.mxu0 %v300
        %347 = vmatpush.msra.mxu0 %v297
        %348 = vmatpush.msra.mxu0 %v294
        %349 = vmatpush.msra.mxu0 %v291
        %350 = vmatpush.msra.mxu0 %v288
        %351 = vmatpush.msra.mxu0 %v285
        %352 = vmatpush.msra.mxu0 %v282
        %353 = vmatpush.msra.mxu0 %v279
        %354 = vmatpush.msra.mxu0 %v276
        %355 = vmatpush.msra.mxu0 %v273
        %356 = vmatmul.f32.gmra.mxu0 %v271
        %v357 = vpop.f32.mrf.mxu0
        %v358 = vadd.f32 0.0, %v357
        %359 = vdwg.mxu0
        %360 = vmatpush.msra.mxu0 %v319
        %361 = vmatpush.msra.mxu0 %v316
        %362 = vmatpush.msra.mxu0 %v313
        %363 = vmatpush.msra.mxu0 %v310
        %364 = vmatpush.msra.mxu0 %v307
        %365 = vmatpush.msra.mxu0 %v304
        %366 = vmatpush.msra.mxu0 %v301
        %367 = vmatpush.msra.mxu0 %v298
        %368 = vmatpush.msra.mxu0 %v295
        %369 = vmatpush.msra.mxu0 %v292
        %370 = vmatpush.msra.mxu0 %v289
        %371 = vmatpush.msra.mxu0 %v286
        %372 = vmatpush.msra.mxu0 %v283
        %373 = vmatpush.msra.mxu0 %v280
        %374 = vmatpush.msra.mxu0 %v277
        %375 = vmatpush.msra.mxu0 %v274
        %376 = vmatmul.f32.gmra.mxu0 %v271
        %v377 = vpop.f32.mrf.mxu0
        %v378 = vadd.f32 0.0, %v377
        %379 = vdwg.mxu0
        %v380 = vmul.f32 %v338, 0.25
        %381 = vst [vmem:[%s256] sm:$0xff] %v380
        %382 = vst [vmem:[%s263] sm:$0xff] %v358
        %383 = vst [vmem:[%s270] sm:$0xff] %v378
        %s384 = sand.u32 %s97, 1
        %s385 = scalar_lea.sflag [#allocation4], %s384
        %s386 = sand.u32 %s97, 1
        %s387 = smul.addr %s386, 8
        %s388 = scalar_lea.vmem [#allocation7], %s387
        %s389 = sand.u32 %s26, 1
        %s390 = scalar_lea.sflag [#allocation9], %s389
        %s391 = sand.u32 %s125, 1
        %s392 = smul.addr %s391, 8
        %s393 = scalar_lea.vmem [#allocation8], %s392
        %s394 = sand.u32 %s26, 1
        %s395 = scalar_lea.sflag [#allocation9], %s394
        %s396 = sand.u32 %s153, 1
        %s397 = smul.addr %s396, 8
        %s398 = scalar_lea.vmem [#allocation10], %s397
        // Predicated region
        $region37: #{tpu_custom_call.1} parent=27 // pred_check
          %p399 = pneg %p107
        $region38: #{tpu_custom_call.1} parent=27 // pred_check_branch
          %401 = sbr.rel (%p399) target = $region40
        $region39: #{tpu_custom_call.1} parent=27 // pred_region
          %403 = vsyncadd %s385, 0
          %s404 = sadd.s32 %s31, %s30
          %s405 = smul.addr %s404, 8
          %s406 = scalar_lea.hbm %s2, %s405
          %s408 = sshll.u32 %s388, 4
          %s409 = int_to_ptr.vmem [resolvable:$true] %s408
          %s410 = sshll.u32 %s406, 4
          %s411 = int_to_ptr.hbm [resolvable:$true] %s410
          %413 = dma.vmem_to_hbm [thread:$0]  %s409, 128, %s411, %s385
        $region40: #{tpu_custom_call.1} parent=27 // pred_fallthru
          _
        // Predicated region
        $region41: #{tpu_custom_call.1} parent=27 // pred_check
          %p414 = pneg %p135
        $region42: #{tpu_custom_call.1} parent=27 // pred_check_branch
          %416 = sbr.rel (%p414) target = $region44
        $region43: #{tpu_custom_call.1} parent=27 // pred_region
          %418 = vsyncadd %s390, 0
          %s419 = sadd.s32 %s31, %s30
          %s420 = smul.addr %s419, 8
          %s421 = scalar_lea.hbm %s3, %s420
          %s423 = sshll.u32 %s393, 4
          %s424 = int_to_ptr.vmem [resolvable:$true] %s423
          %s425 = sshll.u32 %s421, 4
          %s426 = int_to_ptr.hbm [resolvable:$true] %s425
          %428 = dma.vmem_to_hbm [thread:$0]  %s424, 128, %s426, %s390
        $region44: #{tpu_custom_call.1} parent=27 // pred_fallthru
          _
        // Predicated region
        $region45: #{tpu_custom_call.1} parent=27 // pred_check
          %p429 = pneg %p163
        $region46: #{tpu_custom_call.1} parent=27 // pred_check_branch
          %431 = sbr.rel (%p429) target = $region48
        $region47: #{tpu_custom_call.1} parent=27 // pred_region
          %433 = vsyncadd %s395, 0
          %s434 = sadd.s32 %s31, %s30
          %s435 = smul.addr %s434, 8
          %s436 = scalar_lea.hbm %s4, %s435
          %s438 = sshll.u32 %s398, 4
          %s439 = int_to_ptr.vmem [resolvable:$true] %s438
          %s440 = sshll.u32 %s436, 4
          %s441 = int_to_ptr.hbm [resolvable:$true] %s440
          %443 = dma.vmem_to_hbm [thread:$0]  %s439, 128, %s441, %s395
        $region48: #{tpu_custom_call.1} parent=27 // pred_fallthru
          _
      $region28: #{tpu_custom_call.1} parent=5 // pred_fallthru
        _
      %p444 = scmp.le.s32.totalorder 2, %s21
      // Predicated region
      $region49: #{tpu_custom_call.1} parent=5 // pred_check
        %p445 = pneg %p444
      $region50: #{tpu_custom_call.1} parent=5 // pred_check_branch
        %447 = sbr.rel (%p445) target = $region52
      $region51: #{tpu_custom_call.1} parent=5 // pred_region
        %s448 = ssub.s32 %s21, 2
        // Predicated region
        $region53: #{tpu_custom_call.1} parent=51 // pred_check
          %p449 = pneg %p113
        $region54: #{tpu_custom_call.1} parent=51 // pred_check_branch
          %451 = sbr.rel (%p449) target = $region56
        $region55: #{tpu_custom_call.1} parent=51 // pred_region
          %s452 = sand.u32 %s98, 1
          %s453 = scalar_lea.sflag [#allocation4], %s452
          %s454 = sand.u32 %s98, 1
          %s455 = smul.addr %s454, 8
          %s456 = scalar_lea.vmem [#allocation7], %s455
          %458 = dma.done %s453, 128
        $region56: #{tpu_custom_call.1} parent=51 // pred_fallthru
          _
        // Predicated region
        $region57: #{tpu_custom_call.1} parent=51 // pred_check
          %p459 = pneg %p141
        $region58: #{tpu_custom_call.1} parent=51 // pred_check_branch
          %461 = sbr.rel (%p459) target = $region60
        $region59: #{tpu_custom_call.1} parent=51 // pred_region
          %s462 = sand.u32 %s27, 1
          %s463 = scalar_lea.sflag [#allocation9], %s462
          %s464 = sand.u32 %s126, 1
          %s465 = smul.addr %s464, 8
          %s466 = scalar_lea.vmem [#allocation8], %s465
          %468 = dma.done %s463, 128
        $region60: #{tpu_custom_call.1} parent=51 // pred_fallthru
          _
        // Predicated region
        $region61: #{tpu_custom_call.1} parent=51 // pred_check
          %p469 = pneg %p169
        $region62: #{tpu_custom_call.1} parent=51 // pred_check_branch
          %471 = sbr.rel (%p469) target = $region64
        $region63: #{tpu_custom_call.1} parent=51 // pred_region
          %s472 = sand.u32 %s27, 1
          %s473 = scalar_lea.sflag [#allocation9], %s472
          %s474 = sand.u32 %s154, 1
          %s475 = smul.addr %s474, 8
          %s476 = scalar_lea.vmem [#allocation10], %s475
          %478 = dma.done %s473, 128
        $region64: #{tpu_custom_call.1} parent=51 // pred_fallthru
          _
      $region52: #{tpu_custom_call.1} parent=5 // pred_fallthru
        _
    $region6: #{tpu_custom_call.1} parent=1 // loop_footer
      %s25 = sadd.s32 1, %s21
    $region7: #{tpu_custom_call.1} parent=1 // loop_footer_branch
      %20 = sbr.rel target = $region3
    $region8: #{tpu_custom_call.1} parent=1 // loop_exit
      _
    %479 = vsyncpa [#allocation3], 1
    %s480 = scalar_lea.sflag [#allocation3], 1
    %481 = vsyncpa %s480, 1
    %482 = vsyncpa [#allocation6], 1
    %483 = vsyncpa [#allocation4], 1
    %s484 = scalar_lea.sflag [#allocation4], 1
    %485 = vsyncpa %s484, 1
    %486 = vsyncpa [#allocation9], 1
    %s487 = scalar_lea.sflag [#allocation9], 1
    %488 = vsyncpa %s487, 1

// kernel: tpu_custom_call.1
$region0: #{tpu_custom_call.1}
  #allocation0 [shape = 'u32[]', space=smem, size = 0x4, offset = 0x4, fixed_abs, tag = 'smem constant byte address 0x4 - core index']
  #allocation1 [shape = 'u32[72,128]{1,0:T(1,128)}', space=vmem, size = 0x9000, scoped, tag = 'internal scratch']
  %s0 = inlined_call_operand.hbm [shape: f32[2,8,128], index: 0, kind: input, shape index: {}]
  %s1 = inlined_call_operand.hbm [shape: f32[128,384], index: 1, kind: input, shape index: {}]
  %s2 = inlined_call_operand.hbm [shape: f32[2,8,128], index: 2, kind: output, shape index: {0}]
  %s3 = inlined_call_operand.hbm [shape: f32[2,8,128], index: 3, kind: output, shape index: {1}]
  %s4 = inlined_call_operand.hbm [shape: f32[2,8,128], index: 4, kind: output, shape index: {2}]
  %5 = xla_tuple %s2, %s3, %s4
  %s6 = sld [smem:[#allocation0]]
  $region65: #{tpu_custom_call.1} parent=0
    _
  %s8 = ssub.s32 1, %s6
  %s9 = scalar_select 0, %s8, %s6
  $region1: #{tpu_custom_call.1} parent=0
    #allocation2 [shape = 'u8[8192]{0}', space=vmem, size = 0x2000, scoped, tag = 'input window, operand 0']
    #allocation3 [shape = 's32[2]{0}', space=sflag, size = 0x8, scoped, tag = 'scoped memory for tpu_custom_call.1']
    #allocation4 [shape = 's32[2]{0}', space=sflag, size = 0x8, scoped, tag = 'scoped memory for tpu_custom_call.1']
    #allocation5 [shape = 'u8[196608]{0}', space=vmem, size = 0x30000, scoped, tag = 'input window, operand 1, single buffered']
    #allocation6 [shape = 's32[1]{0}', space=sflag, size = 0x4, scoped, tag = 'scoped memory for tpu_custom_call.1']
    #allocation7 [shape = 'u8[8192]{0}', space=vmem, size = 0x2000, scoped, tag = 'output window, operand 0']
    #allocation8 [shape = 'u8[8192]{0}', space=vmem, size = 0x2000, scoped, tag = 'output window, operand 1']
    #allocation9 [shape = 's32[2]{0}', space=sflag, size = 0x8, scoped, tag = 'scoped memory for tpu_custom_call.1']
    #allocation10 [shape = 'u8[8192]{0}', space=vmem, size = 0x2000, scoped, tag = 'output window, operand 2']
    %10 = vsyncpa [#allocation3], 0
    %s11 = scalar_lea.sflag [#allocation3], 1
    %12 = vsyncpa %s11, 0
    %13 = vsyncpa [#allocation6], 0
    %14 = vsyncpa [#allocation4], 0
    %s15 = scalar_lea.sflag [#allocation4], 1
    %16 = vsyncpa %s15, 0
    %17 = vsyncpa [#allocation9], 0
    %s18 = scalar_lea.sflag [#allocation9], 1
    %19 = vsyncpa %s18, 0
    loop: start=0, step=1, limit=4
    $region2: #{tpu_custom_call.1} parent=1 // loop_pre_header
      _
    $region3: #{tpu_custom_call.1} parent=1 // loop_header
      %s21 = sphi 0, %s25
      %p22 = scmp.ge.s32.totalorder %s21, 4
      %s28 = sphi 0, %s40
      %s29 = sphi 0, %s36
      %s30 = sphi 0, %s28
      %s31 = sphi 0, %s29
      %s32 = sphi 0, %s30
      %s33 = sphi 0, %s31
      %s45 = sphi 0, %s47
      %s48 = sphi 0, %s45
      %s49 = sphi 0, %s48
      %s65 = sphi 0, %s49
      %s69 = sphi 0, %s69
      %s71 = sphi 0, %s69
      %s72 = sphi 0, %s71
      %s86 = sphi 0, %s72
      %s94 = sphi 0, %s96
      %s97 = sphi 0, %s94
      %s98 = sphi 0, %s97
      %s114 = sphi 0, %s98
      %s122 = sphi 0, %s124
      %s125 = sphi 0, %s122
      %s126 = sphi 0, %s125
      %s142 = sphi 0, %s126
      %s150 = sphi 0, %s152
      %s153 = sphi 0, %s150
      %s154 = sphi 0, %s153
      %s170 = sphi 0, %s154
    $region4: #{tpu_custom_call.1} parent=1 // loop_header_branch
      %24 = sbr.rel (%p22) target = $region8
    $region5: #{tpu_custom_call.1} parent=1 // loop_body
      %s26 = ssub.s32 %s21, 1
      %s27 = ssub.s32 %s21, 2
      %s34 = sadd.s32 1, %s29
      %p35 = scmp.ge.s32.totalorder %s34, 1
      %s36 = scalar_select %p35, 0, %s34
      %s37 = sadd.s32 1, %s28
      %s38 = scalar_select %p35, %s37, %s28
      %p39 = scmp.ge.s32.totalorder %s38, 2
      %s40 = scalar_select %p39, 0, %s38
      %s41 = ssub.s32 %s28, %s40
      %s42 = ssub.s32 %s29, %s36
      %s43 = sor.u32 %s41, %s42
      %p44 = scmp.eq.s32.totalorder %s43, 0
      %s46 = sadd.s32 %s45, 1
      %s47 = scalar_select %p44, %s45, %s46
      %p50 = pneg %p44
      %p51 = scmp.eq.s32.totalorder %s21, 1
      %p52 = por %p50, %p51
      %p53 = scmp.ne.s32.totalorder %s45, %s48
      %p54 = scmp.eq.s32.totalorder %s21, 0
      %p55 = por %p53, %p54
      %p56 = scmp.ne.s32.totalorder %s45, %s48
      %p57 = scmp.eq.s32.totalorder %s26, 1
      %p58 = por %p56, %p57
      %p59 = scmp.ne.s32.totalorder %s48, %s49
      %p60 = scmp.eq.s32.totalorder %s26, 0
      %p61 = por %p59, %p60
      %p62 = scmp.ne.s32.totalorder %s48, %s49
      %p63 = scmp.eq.s32.totalorder %s27, 1
      %p64 = por %p62, %p63
      %p66 = scmp.ne.s32.totalorder %s49, %s65
      %p67 = scmp.eq.s32.totalorder %s27, 0
      %p68 = por %p66, %p67
      %s70 = sadd.s32 %s69, 1
      %p73 = scmp.eq.s32.totalorder %s21, 1
      %p74 = scmp.ne.s32.totalorder %s69, %s71
      %p75 = scmp.eq.s32.totalorder %s21, 0
      %p76 = por %p74, %p75
      %p77 = scmp.ne.s32.totalorder %s69, %s71
      %p78 = scmp.eq.s32.totalorder %s26, 1
      %p79 = por %p77, %p78
      %p80 = scmp.ne.s32.totalorder %s71, %s72
      %p81 = scmp.eq.s32.totalorder %s26, 0
      %p82 = por %p80, %p81
      %p83 = scmp.ne.s32.totalorder %s71, %s72
      %p84 = scmp.eq.s32.totalorder %s27, 1
      %p85 = por %p83, %p84
      %p87 = scmp.ne.s32.totalorder %s72, %s86
      %p88 = scmp.eq.s32.totalorder %s27, 0
      %p89 = por %p87, %p88
      %s90 = ssub.s32 %s28, %s40
      %s91 = ssub.s32 %s29, %s36
      %s92 = sor.u32 %s90, %s91
      %p93 = scmp.eq.s32.totalorder %s92, 0
      %s95 = sadd.s32 %s94, 1
      %s96 = scalar_select %p93, %s94, %s95
      %p99 = pneg %p93
      %p100 = scmp.eq.s32.totalorder %s21, 1
      %p101 = por %p99, %p100
      %p102 = scmp.ne.s32.totalorder %s94, %s97
      %p103 = scmp.eq.s32.totalorder %s21, 0
      %p104 = por %p102, %p103
      %p105 = scmp.ne.s32.totalorder %s94, %s97
      %p106 = scmp.eq.s32.totalorder %s26, 1
      %p107 = por %p105, %p106
      %p108 = scmp.ne.s32.totalorder %s97, %s98
      %p109 = scmp.eq.s32.totalorder %s26, 0
      %p110 = por %p108, %p109
      %p111 = scmp.ne.s32.totalorder %s97, %s98
      %p112 = scmp.eq.s32.totalorder %s27, 1
      %p113 = por %p111, %p112
      %p115 = scmp.ne.s32.totalorder %s98, %s114
      %p116 = scmp.eq.s32.totalorder %s27, 0
      %p117 = por %p115, %p116
      %s118 = ssub.s32 %s28, %s40
      %s119 = ssub.s32 %s29, %s36
      %s120 = sor.u32 %s118, %s119
      %p121 = scmp.eq.s32.totalorder %s120, 0
      %s123 = sadd.s32 %s122, 1
      %s124 = scalar_select %p121, %s122, %s123
      %p127 = pneg %p121
      %p128 = scmp.eq.s32.totalorder %s21, 1
      %p129 = por %p127, %p128
      %p130 = scmp.ne.s32.totalorder %s122, %s125
      %p131 = scmp.eq.s32.totalorder %s21, 0
      %p132 = por %p130, %p131
      %p133 = scmp.ne.s32.totalorder %s122, %s125
      %p134 = scmp.eq.s32.totalorder %s26, 1
      %p135 = por %p133, %p134
      %p136 = scmp.ne.s32.totalorder %s125, %s126
      %p137 = scmp.eq.s32.totalorder %s26, 0
      %p138 = por %p136, %p137
      %p139 = scmp.ne.s32.totalorder %s125, %s126
      %p140 = scmp.eq.s32.totalorder %s27, 1
      %p141 = por %p139, %p140
      %p143 = scmp.ne.s32.totalorder %s126, %s142
      %p144 = scmp.eq.s32.totalorder %s27, 0
      %p145 = por %p143, %p144
      %s146 = ssub.s32 %s28, %s40
      %s147 = ssub.s32 %s29, %s36
      %s148 = sor.u32 %s146, %s147
      %p149 = scmp.eq.s32.totalorder %s148, 0
      %s151 = sadd.s32 %s150, 1
      %s152 = scalar_select %p149, %s150, %s151
      %p155 = pneg %p149
      %p156 = scmp.eq.s32.totalorder %s21, 1
      %p157 = por %p155, %p156
      %p158 = scmp.ne.s32.totalorder %s150, %s153
      %p159 = scmp.eq.s32.totalorder %s21, 0
      %p160 = por %p158, %p159
      %p161 = scmp.ne.s32.totalorder %s150, %s153
      %p162 = scmp.eq.s32.totalorder %s26, 1
      %p163 = por %p161, %p162
      %p164 = scmp.ne.s32.totalorder %s153, %s154
      %p165 = scmp.eq.s32.totalorder %s26, 0
      %p166 = por %p164, %p165
      %p167 = scmp.ne.s32.totalorder %s153, %s154
      %p168 = scmp.eq.s32.totalorder %s27, 1
      %p169 = por %p167, %p168
      %p171 = scmp.ne.s32.totalorder %s154, %s170
      %p172 = scmp.eq.s32.totalorder %s27, 0
      %p173 = por %p171, %p172
      %p174 = scmp.le.s32.totalorder 1, %s21
      %p175 = scmp.lt.s32.totalorder %s21, 3
      %p176 = pnand %p174, %p175
      %p177 = pneg %p176
      // Predicated region
      $region9: #{tpu_custom_call.1} parent=5 // pred_check
        _
      $region10: #{tpu_custom_call.1} parent=5 // pred_check_branch
        %179 = sbr.rel (%p176) target = $region12
      $region11: #{tpu_custom_call.1} parent=5 // pred_region
        %s180 = ssub.s32 %s21, 1
        // Predicated region
        $region13: #{tpu_custom_call.1} parent=11 // pred_check
          %p181 = pneg %p82
        $region14: #{tpu_custom_call.1} parent=11 // pred_check_branch
          %183 = sbr.rel (%p181) target = $region16
        $region15: #{tpu_custom_call.1} parent=11 // pred_region
          %185 = vsyncadd [#allocation6], 0
          %s186 = sshll.u32 %s1, 4
          %s187 = int_to_ptr.hbm [resolvable:$true] %s186
          %s188 = sshll.u32 [#allocation5], 4
          %s189 = int_to_ptr.vmem [resolvable:$true] %s188
          %194 = dma.hbm_to_vmem [thread:$0]  %s187, 6144, %s189, [#allocation6], 384, 384, 24
        $region16: #{tpu_custom_call.1} parent=11 // pred_fallthru
          _
      $region12: #{tpu_custom_call.1} parent=5 // pred_fallthru
        _
      %p195 = scmp.lt.s32.totalorder %s21, 2
      // Predicated region
      $region17: #{tpu_custom_call.1} parent=5 // pred_check
        %p196 = pneg %p195
      $region18: #{tpu_custom_call.1} parent=5 // pred_check_branch
        %198 = sbr.rel (%p196) target = $region20
      $region19: #{tpu_custom_call.1} parent=5 // pred_region
        // Predicated region
        $region21: #{tpu_custom_call.1} parent=19 // pred_check
          %p199 = pneg %p55
        $region22: #{tpu_custom_call.1} parent=19 // pred_check_branch
          %201 = sbr.rel (%p199) target = $region24
        $region23: #{tpu_custom_call.1} parent=19 // pred_region
          %s202 = sand.u32 %s45, 1
          %s203 = scalar_lea.sflag [#allocation3], %s202
          %s204 = sand.u32 %s45, 1
          %s205 = smul.addr %s204, 8
          %s206 = scalar_lea.vmem [#allocation2], %s205
          %208 = vsyncadd %s203, 0
          %s209 = sadd.s32 %s29, %s28
          %s210 = smul.addr %s209, 8
          %s211 = scalar_lea.hbm %s0, %s210
          %s213 = sshll.u32 %s211, 4
          %s214 = int_to_ptr.hbm [resolvable:$true] %s213
          %s215 = sshll.u32 %s206, 4
          %s216 = int_to_ptr.vmem [resolvable:$true] %s215
          %218 = dma.hbm_to_vmem [thread:$0]  %s214, 128, %s216, %s203
        $region24: #{tpu_custom_call.1} parent=19 // pred_fallthru
          _
      $region20: #{tpu_custom_call.1} parent=5 // pred_fallthru
        _
      %p219 = scmp.le.s32.totalorder 1, %s21
      %p220 = scmp.lt.s32.totalorder %s21, 3
      %p221 = pnand %p219, %p220
      %p222 = pneg %p221
      // Predicated region
      $region25: #{tpu_custom_call.1} parent=5 // pred_check
        _
      $region26: #{tpu_custom_call.1} parent=5 // pred_check_branch
        %224 = sbr.rel (%p221) target = $region28
      $region27: #{tpu_custom_call.1} parent=5 // pred_region
        %s225 = ssub.s32 %s21, 1
        %s226 = sand.u32 %s48, 1
        %s227 = scalar_lea.sflag [#allocation3], %s226
        %s228 = sand.u32 %s48, 1
        %s229 = smul.addr %s228, 8
        %s230 = scalar_lea.vmem [#allocation2], %s229
        // Predicated region
        $region29: #{tpu_custom_call.1} parent=27 // pred_check
          %p231 = pneg %p61
        $region30: #{tpu_custom_call.1} parent=27 // pred_check_branch
          %233 = sbr.rel (%p231) target = $region32
        $region31: #{tpu_custom_call.1} parent=27 // pred_region
          %235 = dma.done %s227, 128
        $region32: #{tpu_custom_call.1} parent=27 // pred_fallthru
          _
        // Predicated region
        $region33: #{tpu_custom_call.1} parent=27 // pred_check
          %p236 = pneg %p82
        $region34: #{tpu_custom_call.1} parent=27 // pred_check_branch
          %238 = sbr.rel (%p236) target = $region36
        $region35: #{tpu_custom_call.1} parent=27 // pred_region
          %240 = dma.done [#allocation6], 6144
        $region36: #{tpu_custom_call.1} parent=27 // pred_fallthru
          _
        %s241 = sand.u32 %s48, 1
        %s242 = scalar_lea.sflag [#allocation3], %s241
        %s243 = sand.u32 %s48, 1
        %s244 = smul.addr %s243, 8
        %s245 = scalar_lea.vmem [#allocation2], %s244
        %p246 = pneg %p61
        %p247 = pneg %p58
        %p248 = pneg %p82
        %p249 = pneg %p79
        %p250 = pneg %p110
        %p251 = pneg %p107
        %s252 = sand.u32 %s97, 1
        %s253 = scalar_lea.sflag [#allocation4], %s252
        %s254 = sand.u32 %s97, 1
        %s255 = smul.addr %s254, 8
        %s256 = scalar_lea.vmem [#allocation7], %s255
        %p257 = pneg %p138
        %p258 = pneg %p135
        %s259 = sand.u32 %s26, 1
        %s260 = scalar_lea.sflag [#allocation9], %s259
        %s261 = sand.u32 %s125, 1
        %s262 = smul.addr %s261, 8
        %s263 = scalar_lea.vmem [#allocation8], %s262
        %p264 = pneg %p166
        %p265 = pneg %p163
        %s266 = sand.u32 %s26, 1
        %s267 = scalar_lea.sflag [#allocation9], %s266
        %s268 = sand.u32 %s153, 1
        %s269 = smul.addr %s268, 8
        %s270 = scalar_lea.vmem [#allocation10], %s269
        %v271 = vld [vmem:[%s230] sm:$0xff]
        %v272 = vld [vmem:[#allocation5] sm:$0xff]
        %v273 = vld [vmem:[#allocation5 + $0x8] sm:$0xff]
        %v274 = vld [vmem:[#allocation5 + $0x10] sm:$0xff]
        %v275 = vld [vmem:[#allocation5 + $0x18] sm:$0xff]
        %v276 = vld [vmem:[#allocation5 + $0x20] sm:$0xff]
        %v277 = vld [vmem:[#allocation5 + $0x28] sm:$0xff]
        %v278 = vld [vmem:[#allocation5 + $0x30] sm:$0xff]
        %v279 = vld [vmem:[#allocation5 + $0x38] sm:$0xff]
        %v280 = vld [vmem:[#allocation5 + $0x40] sm:$0xff]
        %v281 = vld [vmem:[#allocation5 + $0x48] sm:$0xff]
        %v282 = vld [vmem:[#allocation5 + $0x50] sm:$0xff]
        %v283 = vld [vmem:[#allocation5 + $0x58] sm:$0xff]
        %v284 = vld [vmem:[#allocation5 + $0x60] sm:$0xff]
        %v285 = vld [vmem:[#allocation5 + $0x68] sm:$0xff]
        %v286 = vld [vmem:[#allocation5 + $0x70] sm:$0xff]
        %v287 = vld [vmem:[#allocation5 + $0x78] sm:$0xff]
        %v288 = vld [vmem:[#allocation5 + $0x80] sm:$0xff]
        %v289 = vld [vmem:[#allocation5 + $0x88] sm:$0xff]
        %v290 = vld [vmem:[#allocation5 + $0x90] sm:$0xff]
        %v291 = vld [vmem:[#allocation5 + $0x98] sm:$0xff]
        %v292 = vld [vmem:[#allocation5 + $0xa0] sm:$0xff]
        %v293 = vld [vmem:[#allocation5 + $0xa8] sm:$0xff]
        %v294 = vld [vmem:[#allocation5 + $0xb0] sm:$0xff]
        %v295 = vld [vmem:[#allocation5 + $0xb8] sm:$0xff]
        %v296 = vld [vmem:[#allocation5 + $0xc0] sm:$0xff]
        %v297 = vld [vmem:[#allocation5 + $0xc8] sm:$0xff]
        %v298 = vld [vmem:[#allocation5 + $0xd0] sm:$0xff]
        %v299 = vld [vmem:[#allocation5 + $0xd8] sm:$0xff]
        %v300 = vld [vmem:[#allocation5 + $0xe0] sm:$0xff]
        %v301 = vld [vmem:[#allocation5 + $0xe8] sm:$0xff]
        %v302 = vld [vmem:[#allocation5 + $0xf0] sm:$0xff]
        %v303 = vld [vmem:[#allocation5 + $0xf8] sm:$0xff]
        %v304 = vld [vmem:[#allocation5 + $0x100] sm:$0xff]
        %v305 = vld [vmem:[#allocation5 + $0x108] sm:$0xff]
        %v306 = vld [vmem:[#allocation5 + $0x110] sm:$0xff]
        %v307 = vld [vmem:[#allocation5 + $0x118] sm:$0xff]
        %v308 = vld [vmem:[#allocation5 + $0x120] sm:$0xff]
        %v309 = vld [vmem:[#allocation5 + $0x128] sm:$0xff]
        %v310 = vld [vmem:[#allocation5 + $0x130] sm:$0xff]
        %v311 = vld [vmem:[#allocation5 + $0x138] sm:$0xff]
        %v312 = vld [vmem:[#allocation5 + $0x140] sm:$0xff]
        %v313 = vld [vmem:[#allocation5 + $0x148] sm:$0xff]
        %v314 = vld [vmem:[#allocation5 + $0x150] sm:$0xff]
        %v315 = vld [vmem:[#allocation5 + $0x158] sm:$0xff]
        %v316 = vld [vmem:[#allocation5 + $0x160] sm:$0xff]
        %v317 = vld [vmem:[#allocation5 + $0x168] sm:$0xff]
        %v318 = vld [vmem:[#allocation5 + $0x170] sm:$0xff]
        %v319 = vld [vmem:[#allocation5 + $0x178] sm:$0xff]
        %320 = vmatpush.msra.mxu0 %v317
        %321 = vmatpush.msra.mxu0 %v314
        %322 = vmatpush.msra.mxu0 %v311
        %323 = vmatpush.msra.mxu0 %v308
        %324 = vmatpush.msra.mxu0 %v305
        %325 = vmatpush.msra.mxu0 %v302
        %326 = vmatpush.msra.mxu0 %v299
        %327 = vmatpush.msra.mxu0 %v296
        %328 = vmatpush.msra.mxu0 %v293
        %329 = vmatpush.msra.mxu0 %v290
        %330 = vmatpush.msra.mxu0 %v287
        %331 = vmatpush.msra.mxu0 %v284
        %332 = vmatpush.msra.mxu0 %v281
        %333 = vmatpush.msra.mxu0 %v278
        %334 = vmatpush.msra.mxu0 %v275
        %335 = vmatpush.msra.mxu0 %v272
        %336 = vmatmul.f32.gmra.mxu0 %v271
        %v337 = vpop.f32.mrf.mxu0
        %v338 = vadd.f32 0.0, %v337
        %339 = vdwg.mxu0
        %340 = vmatpush.msra.mxu0 %v318
        %341 = vmatpush.msra.mxu0 %v315
        %342 = vmatpush.msra.mxu0 %v312
        %343 = vmatpush.msra.mxu0 %v309
        %344 = vmatpush.msra.mxu0 %v306
        %345 = vmatpush.msra.mxu0 %v303
        %346 = vmatpush.msra.mxu0 %v300
        %347 = vmatpush.msra.mxu0 %v297
        %348 = vmatpush.msra.mxu0 %v294
        %349 = vmatpush.msra.mxu0 %v291
        %350 = vmatpush.msra.mxu0 %v288
        %351 = vmatpush.msra.mxu0 %v285
        %352 = vmatpush.msra.mxu0 %v282
        %353 = vmatpush.msra.mxu0 %v279
        %354 = vmatpush.msra.mxu0 %v276
        %355 = vmatpush.msra.mxu0 %v273
        %356 = vmatmul.f32.gmra.mxu0 %v271
        %v357 = vpop.f32.mrf.mxu0
        %v358 = vadd.f32 0.0, %v357
        %359 = vdwg.mxu0
        %360 = vmatpush.msra.mxu0 %v319
        %361 = vmatpush.msra.mxu0 %v316
        %362 = vmatpush.msra.mxu0 %v313
        %363 = vmatpush.msra.mxu0 %v310
        %364 = vmatpush.msra.mxu0 %v307
        %365 = vmatpush.msra.mxu0 %v304
        %366 = vmatpush.msra.mxu0 %v301
        %367 = vmatpush.msra.mxu0 %v298
        %368 = vmatpush.msra.mxu0 %v295
        %369 = vmatpush.msra.mxu0 %v292
        %370 = vmatpush.msra.mxu0 %v289
        %371 = vmatpush.msra.mxu0 %v286
        %372 = vmatpush.msra.mxu0 %v283
        %373 = vmatpush.msra.mxu0 %v280
        %374 = vmatpush.msra.mxu0 %v277
        %375 = vmatpush.msra.mxu0 %v274
        %376 = vmatmul.f32.gmra.mxu0 %v271
        %v377 = vpop.f32.mrf.mxu0
        %v378 = vadd.f32 0.0, %v377
        %379 = vdwg.mxu0
        %v380 = vmul.f32 %v338, 0.25
        %381 = vst [vmem:[%s256] sm:$0xff] %v380
        %382 = vst [vmem:[%s263] sm:$0xff] %v358
        %383 = vst [vmem:[%s270] sm:$0xff] %v378
        %s384 = sand.u32 %s97, 1
        %s385 = scalar_lea.sflag [#allocation4], %s384
        %s386 = sand.u32 %s97, 1
        %s387 = smul.addr %s386, 8
        %s388 = scalar_lea.vmem [#allocation7], %s387
        %s389 = sand.u32 %s26, 1
        %s390 = scalar_lea.sflag [#allocation9], %s389
        %s391 = sand.u32 %s125, 1
        %s392 = smul.addr %s391, 8
        %s393 = scalar_lea.vmem [#allocation8], %s392
        %s394 = sand.u32 %s26, 1
        %s395 = scalar_lea.sflag [#allocation9], %s394
        %s396 = sand.u32 %s153, 1
        %s397 = smul.addr %s396, 8
        %s398 = scalar_lea.vmem [#allocation10], %s397
        // Predicated region
        $region37: #{tpu_custom_call.1} parent=27 // pred_check
          %p399 = pneg %p107
        $region38: #{tpu_custom_call.1} parent=27 // pred_check_branch
          %401 = sbr.rel (%p399) target = $region40
        $region39: #{tpu_custom_call.1} parent=27 // pred_region
          %403 = vsyncadd %s385, 0
          %s404 = sadd.s32 %s31, %s30
          %s405 = smul.addr %s404, 8
          %s406 = scalar_lea.hbm %s2, %s405
          %s408 = sshll.u32 %s388, 4
          %s409 = int_to_ptr.vmem [resolvable:$true] %s408
          %s410 = sshll.u32 %s406, 4
          %s411 = int_to_ptr.hbm [resolvable:$true] %s410
          %413 = dma.vmem_to_hbm [thread:$0]  %s409, 128, %s411, %s385
        $region40: #{tpu_custom_call.1} parent=27 // pred_fallthru
          _
        // Predicated region
        $region41: #{tpu_custom_call.1} parent=27 // pred_check
          %p414 = pneg %p135
        $region42: #{tpu_custom_call.1} parent=27 // pred_check_branch
          %416 = sbr.rel (%p414) target = $region44
        $region43: #{tpu_custom_call.1} parent=27 // pred_region
          %418 = vsyncadd %s390, 0
          %s419 = sadd.s32 %s31, %s30
          %s420 = smul.addr %s419, 8
          %s421 = scalar_lea.hbm %s3, %s420
          %s423 = sshll.u32 %s393, 4
          %s424 = int_to_ptr.vmem [resolvable:$true] %s423
          %s425 = sshll.u32 %s421, 4
          %s426 = int_to_ptr.hbm [resolvable:$true] %s425
          %428 = dma.vmem_to_hbm [thread:$0]  %s424, 128, %s426, %s390
        $region44: #{tpu_custom_call.1} parent=27 // pred_fallthru
          _
        // Predicated region
        $region45: #{tpu_custom_call.1} parent=27 // pred_check
          %p429 = pneg %p163
        $region46: #{tpu_custom_call.1} parent=27 // pred_check_branch
          %431 = sbr.rel (%p429) target = $region48
        $region47: #{tpu_custom_call.1} parent=27 // pred_region
          %433 = vsyncadd %s395, 0
          %s434 = sadd.s32 %s31, %s30
          %s435 = smul.addr %s434, 8
          %s436 = scalar_lea.hbm %s4, %s435
          %s438 = sshll.u32 %s398, 4
          %s439 = int_to_ptr.vmem [resolvable:$true] %s438
          %s440 = sshll.u32 %s436, 4
          %s441 = int_to_ptr.hbm [resolvable:$true] %s440
          %443 = dma.vmem_to_hbm [thread:$0]  %s439, 128, %s441, %s395
        $region48: #{tpu_custom_call.1} parent=27 // pred_fallthru
          _
      $region28: #{tpu_custom_call.1} parent=5 // pred_fallthru
        _
      %p444 = scmp.le.s32.totalorder 2, %s21
      // Predicated region
      $region49: #{tpu_custom_call.1} parent=5 // pred_check
        %p445 = pneg %p444
      $region50: #{tpu_custom_call.1} parent=5 // pred_check_branch
        %447 = sbr.rel (%p445) target = $region52
      $region51: #{tpu_custom_call.1} parent=5 // pred_region
        %s448 = ssub.s32 %s21, 2
        // Predicated region
        $region53: #{tpu_custom_call.1} parent=51 // pred_check
          %p449 = pneg %p113
        $region54: #{tpu_custom_call.1} parent=51 // pred_check_branch
          %451 = sbr.rel (%p449) target = $region56
        $region55: #{tpu_custom_call.1} parent=51 // pred_region
          %s452 = sand.u32 %s98, 1
          %s453 = scalar_lea.sflag [#allocation4], %s452
          %s454 = sand.u32 %s98, 1
          %s455 = smul.addr %s454, 8
          %s456 = scalar_lea.vmem [#allocation7], %s455
          %458 = dma.done %s453, 128
        $region56: #{tpu_custom_call.1} parent=51 // pred_fallthru
          _
        // Predicated region
        $region57: #{tpu_custom_call.1} parent=51 // pred_check
          %p459 = pneg %p141
        $region58: #{tpu_custom_call.1} parent=51 // pred_check_branch
          %461 = sbr.rel (%p459) target = $region60
        $region59: #{tpu_custom_call.1} parent=51 // pred_region
          %s462 = sand.u32 %s27, 1
          %s463 = scalar_lea.sflag [#allocation9], %s462
          %s464 = sand.u32 %s126, 1
          %s465 = smul.addr %s464, 8
          %s466 = scalar_lea.vmem [#allocation8], %s465
          %468 = dma.done %s463, 128
        $region60: #{tpu_custom_call.1} parent=51 // pred_fallthru
          _
        // Predicated region
        $region61: #{tpu_custom_call.1} parent=51 // pred_check
          %p469 = pneg %p169
        $region62: #{tpu_custom_call.1} parent=51 // pred_check_branch
          %471 = sbr.rel (%p469) target = $region64
        $region63: #{tpu_custom_call.1} parent=51 // pred_region
          %s472 = sand.u32 %s27, 1
          %s473 = scalar_lea.sflag [#allocation9], %s472
          %s474 = sand.u32 %s154, 1
          %s475 = smul.addr %s474, 8
          %s476 = scalar_lea.vmem [#allocation10], %s475
          %478 = dma.done %s473, 128
        $region64: #{tpu_custom_call.1} parent=51 // pred_fallthru
          _
      $region52: #{tpu_custom_call.1} parent=5 // pred_fallthru
        _
    $region6: #{tpu_custom_call.1} parent=1 // loop_footer
      %s25 = sadd.s32 1, %s21
    $region7: #{tpu_custom_call.1} parent=1 // loop_footer_branch
      %20 = sbr.rel target = $region3
    $region8: #{tpu_custom_call.1} parent=1 // loop_exit
      _
    %479 = vsyncpa [#allocation3], 1
    %s480 = scalar_lea.sflag [#allocation3], 1
    %481 = vsyncpa %s480, 1
    %482 = vsyncpa [#allocation6], 1
    %483 = vsyncpa [#allocation4], 1
    %s484 = scalar_lea.sflag [#allocation4], 1
    %485 = vsyncpa %s484, 1
    %486 = vsyncpa [#allocation9], 1
    %s487 = scalar_lea.sflag [#allocation9], 1
    %488 = vsyncpa %s487, 1

</llo_original>
